<compile_context>
chip_gen: v7x
topology: tpu7x:2x2x1
jax: 0.10.0
libtpu: 0.0.40
codegen_flags: <defaults>
</compile_context>

<pallas_src>
import functools

import jax
import jax.numpy as jnp
from jax.experimental import pallas as pl
from jax.experimental.pallas import tpu as pltpu

LANE = 128
SUBLANE = 8
LN_EPS = 1e-5  # torch.nn.LayerNorm default


def _round_up(n, m):
    return ((n + m - 1) // m) * m


# ---------------------------------------------------------------------------
# Kernels
# ---------------------------------------------------------------------------
def _linear_ln_silu_kernel(x_ref, w_ref, b_ref, g_ref, beta_ref, o_ref,
                           *, h_true, bf16_matmul):
    """Fused y = SiLU(LayerNorm(x @ W + b)) on a (tm, Hp) tile."""
    x = x_ref[...]
    w = w_ref[...]
    if bf16_matmul:
        x = x.astype(jnp.bfloat16)
        w = w.astype(jnp.bfloat16)
    # MXU matmul with f32 accumulation.
    y = jnp.dot(x, w, preferred_element_type=jnp.float32)
    y = y + b_ref[...]  # padded columns of W and b are zero -> y[:, h_true:] == 0

    # One-pass LayerNorm statistics over the TRUE feature width (padded columns
    # contribute exactly zero to both sums).
    inv_h = jnp.float32(1.0 / h_true)
    s1 = jnp.sum(y, axis=-1, keepdims=True)
    s2 = jnp.sum(y * y, axis=-1, keepdims=True)
    mean = s1 * inv_h
    var = s2 * inv_h - mean * mean
    y = (y - mean) * jax.lax.rsqrt(var + LN_EPS)
    y = y * g_ref[...] + beta_ref[...]  # padded gamma/beta are zero -> pad cols = 0

    # SiLU(y) = y * sigmoid(y); exp + approx reciprocal both land on the EUP slot.
    o_ref[...] = y * pl.reciprocal(1.0 + jnp.exp(-y), approx=True)


def _linear_silu_kernel(x_ref, w_ref, b_ref, o_ref, *, bf16_matmul):
    """Fused y = SiLU(x @ W + b) (add_norm=False path)."""
    x = x_ref[...]
    w = w_ref[...]
    if bf16_matmul:
        x = x.astype(jnp.bfloat16)
        w = w.astype(jnp.bfloat16)
    y = jnp.dot(x, w, preferred_element_type=jnp.float32)
    y = y + b_ref[...]
    o_ref[...] = y * pl.reciprocal(1.0 + jnp.exp(-y), approx=True)


# ---------------------------------------------------------------------------
# Parameter init / preparation (all padding & reshaping hoisted out of forward)
# ---------------------------------------------------------------------------
def prepare_params(params):
    """Pad the feature axis to a multiple of 128 (lane-dense output) and
    pre-reshape the 1-D vectors to (1, Hp). Done once, not per call."""
    w, b = params["w"], params["b"]
    H = w.shape[1]
    Hp = _round_up(H, LANE)
    pad = Hp - H
    params = dict(params)
    params["out_dim"] = H
    params["w_padded"] = jnp.pad(w, ((0, 0), (0, pad)))
    params["b_padded"] = jnp.pad(b, (0, pad)).reshape(1, Hp)
    if params["add_norm"]:
        params["gamma_padded"] = jnp.pad(params["gamma"], (0, pad)).reshape(1, Hp)
        params["beta_padded"] = jnp.pad(params["beta"], (0, pad)).reshape(1, Hp)
    return params


def init_linear_layer_params(key, input_dim, out_dim, add_norm=True):
    """Mirrors torch.nn.Linear init (U(-1/sqrt(fan_in), ..)) and LayerNorm's
    ones/zeros. Weight is stored pre-transposed as (in, out) so forward is x @ W."""
    kw, kb = jax.random.split(key)
    bound = 1.0 / (float(input_dim) ** 0.5)
    w = jax.random.uniform(kw, (input_dim, out_dim), jnp.float32, -bound, bound)
    b = jax.random.uniform(kb, (out_dim,), jnp.float32, -bound, bound)
    params = {"w": w, "b": b, "add_norm": add_norm}
    if add_norm:
        params["gamma"] = jnp.ones((out_dim,), jnp.float32)
        params["beta"] = jnp.zeros((out_dim,), jnp.float32)
    return prepare_params(params)


# ---------------------------------------------------------------------------
# Forward wrapper (single pallas_call = entire module forward)
# ---------------------------------------------------------------------------
def linear_layer_forward(params, x, *, block_rows=512, bf16_matmul=True,
                         vmem_limit_bytes=64 * 1024 * 1024):
    """SiLU(LayerNorm(x @ W + b)) (or SiLU(x @ W + b) if add_norm=False)."""
    add_norm = params["add_norm"]
    w = params["w_padded"]            # (K, Hp), zero-padded lanes
    b = params["b_padded"]            # (1, Hp)
    K, Hp = w.shape
    H = params["out_dim"]
    B = x.shape[0]

    # Batch tiling: largest sublane-aligned row tile up to `block_rows`.
    # NOTE(v7x): with 64 MiB VMEM, keep 2 bufs x (tm*K + tm*Hp)*4B + weights
    # under the scoped limit; block_rows=512 is safe for these widths.
    tm = min(_round_up(B, SUBLANE), block_rows)
    Bp = _round_up(B, tm)
    if Bp != B:
        x = jnp.pad(x, ((0, Bp - B), (0, 0)))
    grid = (Bp // tm,)

    vmem = pltpu.MemorySpace.VMEM
    x_spec = pl.BlockSpec((tm, K), lambda i: (i, 0), memory_space=vmem)
    w_spec = pl.BlockSpec((K, Hp), lambda i: (0, 0), memory_space=vmem)
    vec_spec = pl.BlockSpec((1, Hp), lambda i: (0, 0), memory_space=vmem)
    out_spec = pl.BlockSpec((tm, Hp), lambda i: (i, 0), memory_space=vmem)

    compiler_params = pltpu.CompilerParams(
        dimension_semantics=("parallel",),   # independent batch tiles (2 TCs on v7x)
        vmem_limit_bytes=vmem_limit_bytes,
    )

    if add_norm:
        kernel = functools.partial(_linear_ln_silu_kernel, h_true=H,
                                   bf16_matmul=bf16_matmul)
        in_specs = [x_spec, w_spec, vec_spec, vec_spec, vec_spec]
        args = (x, w, b, params["gamma_padded"], params["beta_padded"])
    else:
        kernel = functools.partial(_linear_silu_kernel, bf16_matmul=bf16_matmul)
        in_specs = [x_spec, w_spec, vec_spec]
        args = (x, w, b)

    out = pl.pallas_call(
        kernel,
        grid=grid,
        in_specs=in_specs,
        out_specs=out_spec,
        out_shape=jax.ShapeDtypeStruct((Bp, Hp), jnp.float32),
        compiler_params=compiler_params,
    )(*args)

    # Strip batch padding and lane padding (cheap slice).
    return out[:B, :H]


# ---------------------------------------------------------------------------
# Pure-JAX reference (torch semantics)
# ---------------------------------------------------------------------------
def linear_layer_reference(params, x):
    y = x @ params["w"] + params["b"]
    if params["add_norm"]:
        mean = jnp.mean(y, axis=-1, keepdims=True)
        var = jnp.mean((y - mean) ** 2, axis=-1, keepdims=True)
        y = (y - mean) / jnp.sqrt(var + LN_EPS)
        y = y * params["gamma"] + params["beta"]
    return y * jax.nn.sigmoid(y)


if __name__ == "__main__":
    # Small shapes consistent with LinearLayer(input_dim=32, out_dim=32)
    batch, input_dim, out_dim = 8, 32, 32

    key = jax.random.PRNGKey(0)
    key, kx, kp, kp2 = jax.random.split(key, 4)
    x = jax.random.normal(kx, (batch, input_dim), jnp.float32)

    # --- add_norm=True (default LinearLayer) ---
    params = init_linear_layer_params(kp, input_dim, out_dim, add_norm=True)
    out = jax.block_until_ready(linear_layer_forward(params, x))          # bf16 MXU path
    out_f32 = jax.block_until_ready(
        linear_layer_forward(params, x, bf16_matmul=False))               # exact-semantics path
    ref = linear_layer_reference(params, x)

    assert out.shape == (batch, out_dim)
    assert jnp.allclose(out_f32, ref, atol=2e-2, rtol=2e-2), "f32 path mismatch"
    assert jnp.allclose(out, ref, atol=6e-2, rtol=6e-2), "bf16 path mismatch"

    # --- add_norm=False variant ---
    params_nn = init_linear_layer_params(kp2, input_dim, out_dim, add_norm=False)
    out_nn = jax.block_until_ready(linear_layer_forward(params_nn, x))
    ref_nn = linear_layer_reference(params_nn, x)
    assert out_nn.shape == (batch, out_dim)
    assert jnp.allclose(out_nn, ref_nn, atol=6e-2, rtol=6e-2), "no-norm path mismatch"

    print("KERNEL_OK")
</pallas_src>

<mosaic_0001>
module attributes {stable_mosaic.version = 11 : i64} {
  func.func @_linear_ln_silu_kernel(%arg0: i32, %arg1: memref<8x32xf32, #tpu.memory_space<vmem>>, %arg2: memref<32x128xf32, #tpu.memory_space<vmem>>, %arg3: memref<1x128xf32, #tpu.memory_space<vmem>>, %arg4: memref<1x128xf32, #tpu.memory_space<vmem>>, %arg5: memref<1x128xf32, #tpu.memory_space<vmem>>, %arg6: memref<8x128xf32, #tpu.memory_space<vmem>>) attributes {dimension_semantics = [#tpu.dimension_semantics<parallel>], iteration_bounds = array<i64: 1>, scalar_prefetch = 0 : i64, scratch_operands = 0 : i64, tpu.core_type = #tpu.core_type<tc>, window_params = [{transform_indices = @transform_0, window_bounds = array<i64: 8, 32>}, {pipeline_mode = #tpu.pipeline_mode<synchronous>, transform_indices = @transform_1, window_bounds = array<i64: 32, 128>}, {pipeline_mode = #tpu.pipeline_mode<synchronous>, transform_indices = @transform_2, window_bounds = array<i64: 1, 128>}, {pipeline_mode = #tpu.pipeline_mode<synchronous>, transform_indices = @transform_3, window_bounds = array<i64: 1, 128>}, {pipeline_mode = #tpu.pipeline_mode<synchronous>, transform_indices = @transform_4, window_bounds = array<i64: 1, 128>}, {transform_indices = @transform_5, window_bounds = array<i64: 8, 128>}]} {
    %c0 = arith.constant 0 : index
    %c0_0 = arith.constant 0 : index
    %0 = vector.load %arg1[%c0, %c0_0] : memref<8x32xf32, #tpu.memory_space<vmem>>, vector<8x32xf32>
    %c0_1 = arith.constant 0 : index
    %c0_2 = arith.constant 0 : index
    %1 = vector.load %arg2[%c0_1, %c0_2] : memref<32x128xf32, #tpu.memory_space<vmem>>, vector<32x128xf32>
    %2 = arith.truncf %0 : vector<8x32xf32> to vector<8x32xbf16>
    %3 = arith.truncf %1 : vector<32x128xf32> to vector<32x128xbf16>
    %cst = arith.constant dense<0.000000e+00> : vector<8x128xf32>
    %4 = tpu.matmul %2, %3, %cst {dimension_numbers = #tpu.dot_dimension_numbers<[1], [0], [0], [1], [0, 0, 1, 1], [], []>} : vector<8x32xbf16>, vector<32x128xbf16>, vector<8x128xf32> -> vector<8x128xf32>
    %c0_3 = arith.constant 0 : index
    %c0_4 = arith.constant 0 : index
    %5 = vector.load %arg3[%c0_3, %c0_4] : memref<1x128xf32, #tpu.memory_space<vmem>>, vector<1x128xf32>
    %6 = vector.broadcast %5 : vector<1x128xf32> to vector<8x128xf32>
    %7 = arith.addf %4, %6 : vector<8x128xf32>
    %cst_5 = arith.constant dense<0.000000e+00> : vector<8xf32>
    %8 = vector.multi_reduction <add>, %7, %cst_5 [1] : vector<8x128xf32> to vector<8xf32>
    %9 = vector.shape_cast %8 : vector<8xf32> to vector<8x1xf32>
    %10 = arith.mulf %7, %7 : vector<8x128xf32>
    %cst_6 = arith.constant dense<0.000000e+00> : vector<8xf32>
    %11 = vector.multi_reduction <add>, %10, %cst_6 [1] : vector<8x128xf32> to vector<8xf32>
    %12 = vector.shape_cast %11 : vector<8xf32> to vector<8x1xf32>
    %cst_7 = arith.constant 3.125000e-02 : f32
    %13 = vector.broadcast %cst_7 : f32 to vector<8x1xf32>
    %14 = arith.mulf %9, %13 : vector<8x1xf32>
    %cst_8 = arith.constant 3.125000e-02 : f32
    %15 = vector.broadcast %cst_8 : f32 to vector<8x1xf32>
    %16 = arith.mulf %12, %15 : vector<8x1xf32>
    %17 = arith.mulf %14, %14 : vector<8x1xf32>
    %18 = arith.subf %16, %17 : vector<8x1xf32>
    %19 = vector.broadcast %14 : vector<8x1xf32> to vector<8x128xf32>
    %20 = arith.subf %7, %19 : vector<8x128xf32>
    %cst_9 = arith.constant 9.99999974E-6 : f32
    %21 = vector.broadcast %cst_9 : f32 to vector<8x1xf32>
    %22 = arith.addf %18, %21 : vector<8x1xf32>
    %23 = math.rsqrt %22 : vector<8x1xf32>
    %24 = vector.broadcast %23 : vector<8x1xf32> to vector<8x128xf32>
    %25 = arith.mulf %20, %24 : vector<8x128xf32>
    %c0_10 = arith.constant 0 : index
    %c0_11 = arith.constant 0 : index
    %26 = vector.load %arg4[%c0_10, %c0_11] : memref<1x128xf32, #tpu.memory_space<vmem>>, vector<1x128xf32>
    %27 = vector.broadcast %26 : vector<1x128xf32> to vector<8x128xf32>
    %28 = arith.mulf %25, %27 : vector<8x128xf32>
    %c0_12 = arith.constant 0 : index
    %c0_13 = arith.constant 0 : index
    %29 = vector.load %arg5[%c0_12, %c0_13] : memref<1x128xf32, #tpu.memory_space<vmem>>, vector<1x128xf32>
    %30 = vector.broadcast %29 : vector<1x128xf32> to vector<8x128xf32>
    %31 = arith.addf %28, %30 : vector<8x128xf32>
    %cst_14 = arith.constant 0.000000e+00 : f32
    %32 = vector.broadcast %cst_14 : f32 to vector<8x128xf32>
    %33 = arith.subf %32, %31 : vector<8x128xf32>
    %34 = math.exp %33 : vector<8x128xf32>
    %cst_15 = arith.constant 1.000000e+00 : f32
    %35 = vector.broadcast %cst_15 : f32 to vector<8x128xf32>
    %36 = arith.addf %35, %34 : vector<8x128xf32>
    %37 = tpu.reciprocal %36 {approx = true} : vector<8x128xf32> -> vector<8x128xf32>
    %38 = arith.mulf %31, %37 : vector<8x128xf32>
    %c0_16 = arith.constant 0 : index
    %c0_17 = arith.constant 0 : index
    %39 = vector.load %arg6[%c0_16, %c0_17] : memref<8x128xf32, #tpu.memory_space<vmem>>, vector<8x128xf32>
    tpu.vector_store %arg6[%c0_16, %c0_17], %38 {strides = array<i32>} : memref<8x128xf32, #tpu.memory_space<vmem>>, vector<8x128xf32>,
    return
  }
  func.func @transform_0(%arg0: i32) -> (i32, i32) {
    %c0_i32 = arith.constant 0 : i32
    %c0_i32_0 = arith.constant 0 : i32
    return %arg0, %c0_i32 : i32, i32
  }
  func.func @transform_1(%arg0: i32) -> (i32, i32) {
    %c0_i32 = arith.constant 0 : i32
    %c0_i32_0 = arith.constant 0 : i32
    %c0_i32_1 = arith.constant 0 : i32
    return %c0_i32, %c0_i32_0 : i32, i32
  }
  func.func @transform_2(%arg0: i32) -> (i32, i32) {
    %c0_i32 = arith.constant 0 : i32
    %c0_i32_0 = arith.constant 0 : i32
    %c0_i32_1 = arith.constant 0 : i32
    return %c0_i32, %c0_i32_0 : i32, i32
  }
  func.func @transform_3(%arg0: i32) -> (i32, i32) {
    %c0_i32 = arith.constant 0 : i32
    %c0_i32_0 = arith.constant 0 : i32
    %c0_i32_1 = arith.constant 0 : i32
    return %c0_i32, %c0_i32_0 : i32, i32
  }
  func.func @transform_4(%arg0: i32) -> (i32, i32) {
    %c0_i32 = arith.constant 0 : i32
    %c0_i32_0 = arith.constant 0 : i32
    %c0_i32_1 = arith.constant 0 : i32
    return %c0_i32, %c0_i32_0 : i32, i32
  }
  func.func @transform_5(%arg0: i32) -> (i32, i32) {
    %c0_i32 = arith.constant 0 : i32
    %c0_i32_0 = arith.constant 0 : i32
    return %arg0, %c0_i32 : i32, i32
  }
}

</mosaic_0001>

<llo_original>
// kernel: tpu_custom_call.1
$region0: #{tpu_custom_call.1}
  #allocation0 [shape = 'u32[]', space=smem, size = 0x4, offset = 0x4, fixed_abs, tag = 'smem constant byte address 0x4 - core index']
  #allocation1 [shape = 'u32[144,128]{1,0:T(1,128)}', space=vmem, size = 0x12000, scoped, tag = 'internal scratch']
  %s0 = inlined_call_operand.hbm [shape: f32[8,32], index: 0, kind: input, shape index: {}]
  %s1 = inlined_call_operand.hbm [shape: f32[32,128], index: 1, kind: input, shape index: {}]
  %s2 = inlined_call_operand.hbm [shape: f32[1,128], index: 2, kind: input, shape index: {}]
  %s3 = inlined_call_operand.hbm [shape: f32[1,128], index: 3, kind: input, shape index: {}]
  %s4 = inlined_call_operand.hbm [shape: f32[1,128], index: 4, kind: input, shape index: {}]
  %s5 = inlined_call_operand.hbm [shape: f32[8,128], index: 5, kind: output, shape index: {}]
  %s6 = sld [smem:[#allocation0]]
  $region50: #{tpu_custom_call.1} parent=0
    _
  %s8 = ssub.s32 1, %s6
  %s9 = scalar_select 0, %s8, %s6
  $region1: #{tpu_custom_call.1} parent=0
    #allocation2 [shape = 'u8[4096]{0}', space=vmem, size = 0x1000, scoped, tag = 'input window, operand 0, single buffered']
    #allocation3 [shape = 's32[1]{0}', space=sflag, size = 0x4, scoped, tag = 'scoped memory for tpu_custom_call.1']
    #allocation4 [shape = 's32[1]{0}', space=sflag, size = 0x4, scoped, tag = 'scoped memory for tpu_custom_call.1']
    #allocation5 [shape = 'u8[16384]{0}', space=vmem, size = 0x4000, scoped, tag = 'input window, operand 1, single buffered']
    #allocation6 [shape = 's32[1]{0}', space=sflag, size = 0x4, scoped, tag = 'scoped memory for tpu_custom_call.1']
    #allocation7 [shape = 'u8[512]{0}', space=vmem, size = 0x400, scoped, tag = 'input window, operand 2, single buffered']
    #allocation8 [shape = 'u8[512]{0}', space=vmem, size = 0x400, scoped, tag = 'input window, operand 3, single buffered']
    #allocation9 [shape = 's32[1]{0}', space=sflag, size = 0x4, scoped, tag = 'scoped memory for tpu_custom_call.1']
    #allocation10 [shape = 'u8[512]{0}', space=vmem, size = 0x400, scoped, tag = 'input window, operand 4, single buffered']
    #allocation11 [shape = 'u8[4096]{0}', space=vmem, size = 0x1000, scoped, tag = 'output window, operand 0, single buffered']
    %10 = vsyncpa [#allocation3], 0
    %11 = vsyncpa [#allocation6], 0
    %12 = vsyncpa [#allocation9], 0
    %13 = vsyncpa [#allocation4], 0
    // Predicated region
    $region2: #{tpu_custom_call.1} parent=1 // pred_check
      _
    $region3: #{tpu_custom_call.1} parent=1 // pred_check_branch
      %15 = sbr.rel (0) target = $region5
    $region4: #{tpu_custom_call.1} parent=1 // pred_region
      %s17 = ssub.s32 128, 128
      %18 = vsyncadd [#allocation3], %s17
      %s20 = sshll.u32 [#allocation2], 4
      %s21 = int_to_ptr.vmem [resolvable:$true] %s20
      %23 = dma.hbm_to_vmem [thread:$0]  %s0, 128, %s21, [#allocation3]
    $region5: #{tpu_custom_call.1} parent=1 // pred_fallthru
      _
    // Predicated region
    $region6: #{tpu_custom_call.1} parent=1 // pred_check
      _
    $region7: #{tpu_custom_call.1} parent=1 // pred_check_branch
      %25 = sbr.rel (0) target = $region9
    $region8: #{tpu_custom_call.1} parent=1 // pred_region
      %s27 = ssub.s32 512, 512
      %28 = vsyncadd [#allocation6], %s27
      %s29 = sshll.u32 [#allocation5], 4
      %s30 = int_to_ptr.vmem [resolvable:$true] %s29
      %35 = dma.hbm_to_vmem [thread:$0]  %s1, 512, %s30, [#allocation6], 128, 128, 8
    $region9: #{tpu_custom_call.1} parent=1 // pred_fallthru
      _
    // Predicated region
    $region10: #{tpu_custom_call.1} parent=1 // pred_check
      _
    $region11: #{tpu_custom_call.1} parent=1 // pred_check_branch
      %37 = sbr.rel (0) target = $region13
    $region12: #{tpu_custom_call.1} parent=1 // pred_region
      %s39 = ssub.s32 16, 16
      %40 = vsyncadd [#allocation6], %s39
      %s42 = sshll.u32 [#allocation7], 4
      %s43 = int_to_ptr.vmem [resolvable:$true] %s42
      %45 = dma.hbm_to_vmem [thread:$0]  %s2, 16, %s43, [#allocation6]
    $region13: #{tpu_custom_call.1} parent=1 // pred_fallthru
      _
    // Predicated region
    $region14: #{tpu_custom_call.1} parent=1 // pred_check
      _
    $region15: #{tpu_custom_call.1} parent=1 // pred_check_branch
      %47 = sbr.rel (0) target = $region17
    $region16: #{tpu_custom_call.1} parent=1 // pred_region
      %s49 = ssub.s32 16, 16
      %50 = vsyncadd [#allocation9], %s49
      %s52 = sshll.u32 [#allocation8], 4
      %s53 = int_to_ptr.vmem [resolvable:$true] %s52
      %55 = dma.hbm_to_vmem [thread:$0]  %s3, 16, %s53, [#allocation9]
    $region17: #{tpu_custom_call.1} parent=1 // pred_fallthru
      _
    // Predicated region
    $region18: #{tpu_custom_call.1} parent=1 // pred_check
      _
    $region19: #{tpu_custom_call.1} parent=1 // pred_check_branch
      %57 = sbr.rel (0) target = $region21
    $region20: #{tpu_custom_call.1} parent=1 // pred_region
      %s59 = ssub.s32 16, 16
      %60 = vsyncadd [#allocation9], %s59
      %s62 = sshll.u32 [#allocation10], 4
      %s63 = int_to_ptr.vmem [resolvable:$true] %s62
      %65 = dma.hbm_to_vmem [thread:$0]  %s4, 16, %s63, [#allocation9]
    $region21: #{tpu_custom_call.1} parent=1 // pred_fallthru
      _
    // Predicated region
    $region22: #{tpu_custom_call.1} parent=1 // pred_check
      _
    $region23: #{tpu_custom_call.1} parent=1 // pred_check_branch
      %67 = sbr.rel (0) target = $region25
    $region24: #{tpu_custom_call.1} parent=1 // pred_region
      %68 = dma.done [#allocation3], 128
    $region25: #{tpu_custom_call.1} parent=1 // pred_fallthru
      _
    // Predicated region
    $region26: #{tpu_custom_call.1} parent=1 // pred_check
      _
    $region27: #{tpu_custom_call.1} parent=1 // pred_check_branch
      %70 = sbr.rel (0) target = $region29
    $region28: #{tpu_custom_call.1} parent=1 // pred_region
      %71 = dma.done [#allocation6], 512
    $region29: #{tpu_custom_call.1} parent=1 // pred_fallthru
      _
    // Predicated region
    $region30: #{tpu_custom_call.1} parent=1 // pred_check
      _
    $region31: #{tpu_custom_call.1} parent=1 // pred_check_branch
      %73 = sbr.rel (0) target = $region33
    $region32: #{tpu_custom_call.1} parent=1 // pred_region
      %74 = dma.done [#allocation6], 16
    $region33: #{tpu_custom_call.1} parent=1 // pred_fallthru
      _
    // Predicated region
    $region34: #{tpu_custom_call.1} parent=1 // pred_check
      _
    $region35: #{tpu_custom_call.1} parent=1 // pred_check_branch
      %76 = sbr.rel (0) target = $region37
    $region36: #{tpu_custom_call.1} parent=1 // pred_region
      %77 = dma.done [#allocation9], 16
    $region37: #{tpu_custom_call.1} parent=1 // pred_fallthru
      _
    // Predicated region
    $region38: #{tpu_custom_call.1} parent=1 // pred_check
      _
    $region39: #{tpu_custom_call.1} parent=1 // pred_check_branch
      %79 = sbr.rel (0) target = $region41
    $region40: #{tpu_custom_call.1} parent=1 // pred_region
      %80 = dma.done [#allocation9], 16
    $region41: #{tpu_custom_call.1} parent=1 // pred_fallthru
      _
    %v82 = vld [vmem:[#allocation2] sm:$0xff]
    %v83 = vld [vmem:[#allocation5] sm:$0xff]
    %v84 = vld [vmem:[#allocation5 + $0x8] sm:$0xff]
    %v85 = vld [vmem:[#allocation5 + $0x10] sm:$0xff]
    %v86 = vld [vmem:[#allocation5 + $0x18] sm:$0xff]
    %v87 = vpack.c.bf16 %v82, %v82
    %v88 = vpack.c.bf16 %v84, %v83
    %v89 = vpack.c.bf16 %v86, %v85
    %v90 = vld [vmem:[#allocation7] sm:$0x1]
    %v92 = vlaneseq
    %v93 = vshrl.u32 %v92, 7
    %v94 = vsub.s32 0, %v93
    %v95 = vrot.slane %v90, %v94
    %vm97 = vcmask 261120
    %v99 = vsel %vm97, %v87, 0
    %101 = vmatprep.subr.bf16.mxu0 0
    %102 = vmatpush1.bf16.msra.mxu0 %v88
    %103 = vmatprep.subr.bf16.mxu0 0
    %104 = vmatpush1.bf16.msra.mxu0 %v89
    %105 = vmatprep.subr.bf16.mxu0 0
    %106 = vmatpush1.bf16.msra.mxu0 0
    %107 = vmatprep.subr.bf16.mxu0 0
    %108 = vmatpush1.bf16.msra.mxu0 0
    %109 = vmatprep.subr.bf16.mxu0 0
    %110 = vmatpush1.bf16.msra.mxu0 0
    %111 = vmatprep.subr.bf16.mxu0 0
    %112 = vmatpush1.bf16.msra.mxu0 0
    %113 = vmatprep.subr.bf16.mxu0 0
    %114 = vmatpush1.bf16.msra.mxu0 0
    %115 = vmatprep.subr.bf16.mxu0 0
    %116 = vmatpush1.bf16.msra.mxu0 0
    %117 = vmatprep.subr.bf16.mxu0 0
    %118 = vmatpush1.bf16.msra.mxu0 0
    %119 = vmatprep.subr.bf16.mxu0 0
    %120 = vmatpush1.bf16.msra.mxu0 0
    %121 = vmatprep.subr.bf16.mxu0 0
    %122 = vmatpush1.bf16.msra.mxu0 0
    %123 = vmatprep.subr.bf16.mxu0 0
    %124 = vmatpush1.bf16.msra.mxu0 0
    %125 = vmatprep.subr.bf16.mxu0 0
    %126 = vmatpush1.bf16.msra.mxu0 0
    %127 = vmatprep.subr.bf16.mxu0 0
    %128 = vmatpush1.bf16.msra.mxu0 0
    %129 = vmatprep.subr.bf16.mxu0 0
    %130 = vmatpush1.bf16.msra.mxu0 0
    %131 = vmatprep.subr.bf16.mxu0 0
    %132 = vmatpush1.bf16.msra.mxu0 0
    %133 = vmatprep.mubr.bf16.mxu0 0
    %134 = vmatmul.mubr.bf16.gmra.mrb[0].mxu0 %v99
    %v135 = vpop.f32.mrb[0].mxu0
    %v136 = vadd.f32 %v95, %v135
    %v137 = vpop.f32.mrb[0].mxu0
    %v138 = vpop.f32.mrb[0].mxu0
    %v139 = vpop.f32.mrb[0].mxu0
    %140 = vdwg.mxu0
    %141 = vadd.xlane.f32.xlu0 %v136
    %v142 = vpop.xlane.xlu0 %141
    %v143 = vmul.f32 %v136, %v136
    %144 = vadd.xlane.f32.xlu0 %v143
    %v145 = vpop.xlane.xlu0 %144
    %v146 = vmul.f32 %v142, 0.03125
    %v147 = vmul.f32 %v145, 0.03125
    %v148 = vmul.f32 %v146, %v146
    %v149 = vsub.f32 %v147, %v148
    %v150 = vsub.f32 %v136, %v146
    %v151 = vadd.f32 %v149, 1e-05
    %v152 = vrsqrt.pop %v151
    %v153 = vmul.f32 %v150, %v152
    %v154 = vld [vmem:[#allocation8] sm:$0x1]
    %v156 = vlaneseq
    %v157 = vshrl.u32 %v156, 7
    %v158 = vsub.s32 0, %v157
    %v159 = vrot.slane %v154, %v158
    %v161 = vmul.f32 %v153, %v159
    %v162 = vld [vmem:[#allocation10] sm:$0x1]
    %v164 = vlaneseq
    %v165 = vshrl.u32 %v164, 7
    %v166 = vsub.s32 0, %v165
    %v167 = vrot.slane %v162, %v166
    %v169 = vadd.f32 %v161, %v167
    %v170 = vsub.f32 0.0, %v169
    %v171 = vmul.f32 %v170, 1.442695
    %v172 = vpow.pop %v171
    %v173 = vadd.f32 %v172, 1.0
    %v174 = vrcp.pop %v173
    %v175 = vmul.f32 %v169, %v174
    %176 = vst [vmem:[#allocation11] sm:$0xff] %v175
    // Predicated region
    $region42: #{tpu_custom_call.1} parent=1 // pred_check
      _
    $region43: #{tpu_custom_call.1} parent=1 // pred_check_branch
      %178 = sbr.rel (0) target = $region45
    $region44: #{tpu_custom_call.1} parent=1 // pred_region
      %s180 = ssub.s32 128, 128
      %181 = vsyncadd [#allocation4], %s180
      %s183 = sshll.u32 [#allocation11], 4
      %s184 = int_to_ptr.vmem [resolvable:$true] %s183
      %186 = dma.vmem_to_hbm [thread:$0]  %s184, 128, %s5, [#allocation4]
    $region45: #{tpu_custom_call.1} parent=1 // pred_fallthru
      _
    // Predicated region
    $region46: #{tpu_custom_call.1} parent=1 // pred_check
      _
    $region47: #{tpu_custom_call.1} parent=1 // pred_check_branch
      %188 = sbr.rel (0) target = $region49
    $region48: #{tpu_custom_call.1} parent=1 // pred_region
      %189 = dma.done [#allocation4], 128
    $region49: #{tpu_custom_call.1} parent=1 // pred_fallthru
      _
    %190 = vsyncpa [#allocation3], 1
    %191 = vsyncpa [#allocation6], 1
    %192 = vsyncpa [#allocation9], 1
    %193 = vsyncpa [#allocation4], 1

</llo_original>
